<compile_context>
chip_gen: v5e
topology: v5e:2x2
jax: 0.10.0
libtpu: 0.0.40
codegen_flags: <defaults>
</compile_context>

<pallas_src>
import jax
import jax.numpy as jnp
from jax.experimental import pallas as pl
from jax.experimental.pallas import tpu as pltpu


# ----------------------------- Pallas kernel --------------------------------

def _scale_kernel(alpha_ref, g_ref, o_ref):
    # alpha_ref: f32 scalar in SMEM (scalar prefetch). Multiply in f32, cast
    # back to the gradient dtype on store (exact for f32, unbiased for bf16).
    a = alpha_ref[0]
    o_ref[...] = (g_ref[...].astype(jnp.float32) * a).astype(o_ref.dtype)


# ------------------------------ wrapper --------------------------------------

def _choose_slab(n):
    """Pick the widest lane-dense (rows, lanes) layout for n elements."""
    for lanes in (4096, 2048, 1024, 512, 256, 128):
        if n % lanes == 0:
            return n // lanes, lanes, 0
    # Ragged fallback: pad only up to the next 128-lane row (rare path).
    lanes = 128
    rows = -(-n // lanes)
    return rows, lanes, rows * lanes - n


def _scale_pallas(g, alpha):
    """Elementwise grad * alpha on TPU via a tiled Pallas kernel."""
    orig_shape, orig_dtype = g.shape, g.dtype
    n = g.size
    itemsize = jnp.dtype(orig_dtype).itemsize

    rows, lanes, pad = _choose_slab(n)
    flat = g.reshape(-1)
    if pad:
        # TODO(synk): ragged sizes take one pad copy; could use a masked tail
        # block instead, but all common NCHW grads hit the pad == 0 fast path.
        flat = jnp.pad(flat, (0, pad))
    slab = flat.reshape(rows, lanes)

    # Block sizing: ~2 MiB per buffer. With double-buffered in + out that is
    # ~8 MiB of VMEM — comfortably inside the 32 MiB scoped limit on every
    # chip (incl. v7x). Sublane dim aligned to the dtype's packing (8 for f32,
    # 16 for bf16, ...); a full-extent row dim is always legal.
    sub_align = max(8, 32 // itemsize)
    target_bytes = 2 * 1024 * 1024
    tr = max(1, target_bytes // (lanes * itemsize))
    if tr >= rows:
        tr = rows
    else:
        tr = max(sub_align, (tr // sub_align) * sub_align)
        tr = min(tr, rows)

    grid = (pl.cdiv(rows, tr),)
    alpha_arr = jnp.asarray([alpha], dtype=jnp.float32)  # exact f32 scale in SMEM

    out = pl.pallas_call(
        _scale_kernel,
        out_shape=jax.ShapeDtypeStruct((rows, lanes), slab.dtype),
        grid_spec=pltpu.PrefetchScalarGridSpec(
            num_scalar_prefetch=1,
            grid=grid,
            in_specs=[pl.BlockSpec((tr, lanes), lambda i, a: (i, 0))],
            out_specs=pl.BlockSpec((tr, lanes), lambda i, a: (i, 0)),
        ),
        compiler_params=pltpu.CompilerParams(
            dimension_semantics=("parallel",),   # shard row-blocks across TCs (v7x)
            vmem_limit_bytes=32 * 1024 * 1024,
        ),
        # Reuse the cotangent's HBM buffer for the output (alpha is input 0).
        input_output_aliases={1: 0},
    )(alpha_arr, slab)

    result = out.reshape(-1)
    if pad:
        result = result[:n]
    return result.reshape(orig_shape).astype(orig_dtype)


# --------------------------- GradientScale module ----------------------------

@jax.custom_vjp
def scalegrad(x, alpha):
    # Forward: pure identity — no kernel, no copy.
    return x


def _scalegrad_fwd(x, alpha):
    return x, alpha


def _scalegrad_bwd(alpha, g):
    # Backward: grad * alpha via the Pallas kernel; alpha gets no gradient.
    return _scale_pallas(g, alpha), jnp.zeros_like(alpha)


scalegrad.defvjp(_scalegrad_fwd, _scalegrad_bwd)


class GradientScale:
    """JAX/Pallas port of the PyTorch GradientScale module."""

    def __init__(self, alpha):
        self.alpha = jnp.asarray(alpha, dtype=jnp.float32)

    def __call__(self, x):
        return scalegrad(x, self.alpha)


# ----------------------------------- main ------------------------------------

if __name__ == "__main__":
    key = jax.random.PRNGKey(0)
    x = jax.random.normal(key, (2, 4, 16, 16), dtype=jnp.float32)  # NCHW

    module = GradientScale(alpha=0.25)

    # Forward: exact identity (no Pallas kernel, zero extra HBM traffic).
    y = jax.block_until_ready(module(x))
    assert y.shape == x.shape and y.dtype == x.dtype
    assert bool(jnp.all(y == x))

    # Backward: runs the Pallas scale kernel; d(sum(y))/dx == alpha everywhere.
    g = jax.block_until_ready(jax.grad(lambda xx: jnp.sum(module(xx)))(x))
    assert g.shape == x.shape and g.dtype == x.dtype
    assert bool(jnp.allclose(g, 0.25))

    # Same result under jit.
    gj = jax.block_until_ready(jax.jit(jax.grad(lambda xx: jnp.sum(module(xx))))(x))
    assert bool(jnp.allclose(gj, 0.25))

    print("KERNEL_OK")
</pallas_src>

<mosaic_0001>
module attributes {stable_mosaic.version = 11 : i64} {
  func.func @_scale_kernel(%arg0: i32, %arg1: memref<1xf32, #tpu.memory_space<smem>>, %arg2: memref<1x2048xf32, #tpu.memory_space<vmem>>, %arg3: memref<1x2048xf32, #tpu.memory_space<vmem>>) attributes {dimension_semantics = [#tpu.dimension_semantics<parallel>], iteration_bounds = array<i64: 1>, scalar_prefetch = 1 : i64, scratch_operands = 0 : i64, tpu.core_type = #tpu.core_type<tc>, window_params = [{transform_indices = @transform_0, window_bounds = array<i64: 1, 2048>}, {transform_indices = @transform_1, window_bounds = array<i64: 1, 2048>}]} {
    %c0 = arith.constant 0 : index
    %0 = memref.load %arg1[%c0] : memref<1xf32, #tpu.memory_space<smem>>
    %c0_0 = arith.constant 0 : index
    %c0_1 = arith.constant 0 : index
    %1 = vector.load %arg2[%c0_0, %c0_1] : memref<1x2048xf32, #tpu.memory_space<vmem>>, vector<1x2048xf32>
    %2 = vector.broadcast %0 : f32 to vector<1x2048xf32>
    %3 = arith.mulf %1, %2 : vector<1x2048xf32>
    %c0_2 = arith.constant 0 : index
    %c0_3 = arith.constant 0 : index
    %4 = vector.load %arg3[%c0_2, %c0_3] : memref<1x2048xf32, #tpu.memory_space<vmem>>, vector<1x2048xf32>
    tpu.vector_store %arg3[%c0_2, %c0_3], %3 {strides = array<i32>} : memref<1x2048xf32, #tpu.memory_space<vmem>>, vector<1x2048xf32>,
    return
  }
  func.func @transform_0(%arg0: i32, %arg1: memref<1xf32, #tpu.memory_space<smem>>) -> (i32, i32) {
    %c0_i32 = arith.constant 0 : i32
    %c0_i32_0 = arith.constant 0 : i32
    return %arg0, %c0_i32 : i32, i32
  }
  func.func @transform_1(%arg0: i32, %arg1: memref<1xf32, #tpu.memory_space<smem>>) -> (i32, i32) {
    %c0_i32 = arith.constant 0 : i32
    %c0_i32_0 = arith.constant 0 : i32
    return %arg0, %c0_i32 : i32, i32
  }
}

</mosaic_0001>

<llo_original>
// kernel: tpu_custom_call.1
$region0: #{tpu_custom_call.1}
  #allocation0 [shape = 'u32[]', space=smem, size = 0x4, offset = 0x4, fixed_abs, tag = 'smem constant byte address 0x4 - core index']
  #allocation1 [shape = 'u32[72,128]{1,0:T(1,128)}', space=vmem, size = 0x9000, scoped, tag = 'internal scratch']
  #allocation2 [shape = 's32[1]{0}', space=sflag, size = 0x4, scoped, tag = 'scoped memory for tpu_custom_call.1']
  #allocation3 [shape = 'f32[1]{0:T(128)S(6)}', space=smem, size = 0x200, scoped, tag = 'prefetched SMEM operand 0']
  %s0 = inlined_call_operand.<no memory space> [shape: f32[1], index: 0, kind: input, shape index: {}]
  %s1 = inlined_call_operand.hbm [shape: f32[1,2048], index: 1, kind: input, shape index: {}, may-alias: {1,2}]
  %s2 = inlined_call_operand.hbm [shape: f32[1,2048], index: 2, kind: output, shape index: {}, may-alias: {1,2}]
  %s3 = sld [smem:[#allocation0]]
  $region18: #{tpu_custom_call.1} parent=0
    _
  %s5 = ssub.s32 1, %s3
  %s6 = scalar_select 0, %s5, %s3
  %7 = sst [smem:[#allocation3]] %s0
  $region1: #{tpu_custom_call.1} parent=0
    #allocation4 [shape = 'u8[8192]{0}', space=vmem, size = 0x2000, scoped, tag = 'input window, operand 1, single buffered']
    #allocation5 [shape = 's32[1]{0}', space=sflag, size = 0x4, scoped, tag = 'scoped memory for tpu_custom_call.1']
    #allocation6 [shape = 's32[1]{0}', space=sflag, size = 0x4, scoped, tag = 'scoped memory for tpu_custom_call.1']
    #allocation7 [shape = 'u8[8192]{0}', space=vmem, size = 0x2000, scoped, tag = 'output window, operand 0, single buffered']
    %8 = vsyncpa [#allocation5], 0
    %9 = vsyncpa [#allocation6], 0
    // Predicated region
    $region2: #{tpu_custom_call.1} parent=1 // pred_check
      _
    $region3: #{tpu_custom_call.1} parent=1 // pred_check_branch
      %11 = sbr.rel (0) target = $region5
    $region4: #{tpu_custom_call.1} parent=1 // pred_region
      %13 = vsyncadd [#allocation5], 0
      %s15 = sshll.u32 %s1, 4
      %s16 = int_to_ptr.hbm [resolvable:$true] %s15
      %s17 = sshll.u32 [#allocation4], 4
      %s18 = int_to_ptr.vmem [resolvable:$true] %s17
      %20 = dma.hbm_to_vmem [thread:$0]  %s16, 256, %s18, [#allocation5]
    $region5: #{tpu_custom_call.1} parent=1 // pred_fallthru
      _
    // Predicated region
    $region6: #{tpu_custom_call.1} parent=1 // pred_check
      _
    $region7: #{tpu_custom_call.1} parent=1 // pred_check_branch
      %22 = sbr.rel (0) target = $region9
    $region8: #{tpu_custom_call.1} parent=1 // pred_region
      %24 = dma.done [#allocation5], 256
    $region9: #{tpu_custom_call.1} parent=1 // pred_fallthru
      _
    %s25 = sld [smem:[#allocation3]]
    %v26 = vld [vmem:[#allocation4] sm:$0xff]
    %v27 = vld [vmem:[#allocation4 + $0x8] sm:$0xff]
    %v28 = vstv %s25
    %v29 = vmul.f32 %v26, %v28
    %v30 = vmul.f32 %v27, %v28
    %31 = vst [vmem:[#allocation7] sm:$0xff] %v29
    %32 = vst [vmem:[#allocation7 + $0x8] sm:$0xff] %v30
    // Predicated region
    $region10: #{tpu_custom_call.1} parent=1 // pred_check
      _
    $region11: #{tpu_custom_call.1} parent=1 // pred_check_branch
      %34 = sbr.rel (0) target = $region13
    $region12: #{tpu_custom_call.1} parent=1 // pred_region
      %36 = vsyncadd [#allocation6], 0
      %s38 = sshll.u32 [#allocation7], 4
      %s39 = int_to_ptr.vmem [resolvable:$true] %s38
      %s40 = sshll.u32 %s2, 4
      %s41 = int_to_ptr.hbm [resolvable:$true] %s40
      %43 = dma.vmem_to_hbm [thread:$0]  %s39, 256, %s41, [#allocation6]
    $region13: #{tpu_custom_call.1} parent=1 // pred_fallthru
      _
    // Predicated region
    $region14: #{tpu_custom_call.1} parent=1 // pred_check
      _
    $region15: #{tpu_custom_call.1} parent=1 // pred_check_branch
      %45 = sbr.rel (0) target = $region17
    $region16: #{tpu_custom_call.1} parent=1 // pred_region
      %47 = dma.done [#allocation6], 256
    $region17: #{tpu_custom_call.1} parent=1 // pred_fallthru
      _
    %48 = vsyncpa [#allocation5], 1
    %49 = vsyncpa [#allocation6], 1

</llo_original>
